<compile_context>
chip_gen: v7x
topology: tpu7x:2x2x1
jax: 0.10.0
libtpu: 0.0.40
codegen_flags: <defaults>
</compile_context>

<pallas_src>
import jax
import jax.numpy as jnp
from jax.experimental import pallas as pl
from jax.experimental.pallas import tpu as pltpu

MARGIN = 1.0
EPS = 1e-6            # F.pairwise_distance default eps (added elementwise to the difference)
NUM_SPLITS = 2        # leading 'parallel' grid axis (second TensorCore on megacore chips)
_TARGET_TILE_BYTES = 2 * 1024 * 1024   # ~2 MiB per input tile -> good HBM streaming


def _round_up(x, m):
    return ((x + m - 1) // m) * m


def _default_block_rows(batch, feat, itemsize):
    tb = max(8, _TARGET_TILE_BYTES // max(1, feat * itemsize))
    tb = max(8, min(tb, pl.cdiv(batch, NUM_SPLITS)))
    return _round_up(tb, 8)


def improved_contrastive_loss(output1, output2, label, *, margin=MARGIN, block_rows=None):
    """output1, output2: (B, D) float (f32 or bf16); label: (B, 1) or (B,) with values in {0, 1}."""
    output1 = jnp.asarray(output1)
    output2 = jnp.asarray(output2)
    batch, feat = output1.shape
    label_f = jnp.asarray(label).astype(jnp.float32).reshape(batch, 1)

    in_itemsize = max(output1.dtype.itemsize, output2.dtype.itemsize)
    if batch <= 8:
        block_rows = batch                              # full-dim block (no sublane constraint)
    else:
        if block_rows is None:
            block_rows = _default_block_rows(batch, feat, in_itemsize)
        block_rows = max(8, (int(block_rows) // 8) * 8)  # sublane-aligned
        block_rows = min(block_rows, (batch // 8) * 8)   # never larger than the array

    total_blocks = pl.cdiv(batch, block_rows)
    blocks_per_split = pl.cdiv(total_blocks, NUM_SPLITS)
    last_block = total_blocks - 1

    def row_block_map(i, j):
        # Clamp so a split never issues a fully out-of-range block read; the duplicate
        # (clamped) block is zeroed out inside the kernel by the row-validity mask.
        return (jnp.minimum(i * blocks_per_split + j, last_block), 0)

    def kernel(o1_ref, o2_ref, lab_ref, out_ref):
        i = pl.program_id(0)
        j = pl.program_id(1)

        @pl.when(j == 0)
        def _init():
            out_ref[...] = jnp.zeros_like(out_ref)

        o1 = o1_ref[...].astype(jnp.float32)      # (TB, D)
        o2 = o2_ref[...].astype(jnp.float32)      # (TB, D)
        lab = lab_ref[...].astype(jnp.float32)    # (TB, 1)

        # Logical (unclamped) rows this grid step is responsible for.
        blk = i * blocks_per_split + j
        row = blk * block_rows + jax.lax.broadcasted_iota(jnp.int32, (block_rows, 1), 0)
        valid = row < batch                       # (TB, 1) bool; kills tail / duplicate rows

        # pairwise euclidean distance per row (matches F.pairwise_distance p=2, eps on diff)
        diff = o1 - o2 + EPS
        d2 = jnp.sum(diff * diff, axis=1, keepdims=True)   # (TB, 1) squared distance
        dist = jnp.sqrt(d2)                                 # sqrt goes to the EUP slot
        hinge = jnp.maximum(margin - dist, 0.0)

        pos = jnp.logical_and(valid, lab == 1.0)
        neg = jnp.logical_and(valid, lab == 0.0)

        # jnp.where (not multiply-by-mask) so garbage-padded tail rows never contaminate sums.
        pos_sum = jnp.sum(jnp.where(pos, d2, 0.0))
        neg_sum = jnp.sum(jnp.where(neg, hinge * hinge, 0.0))
        pos_cnt = jnp.sum(jnp.where(pos, 1.0, 0.0))
        neg_cnt = jnp.sum(jnp.where(neg, 1.0, 0.0))

        # Pack the four partial scalars into sublanes 0..3 of the resident output block.
        sub = jax.lax.broadcasted_iota(jnp.int32, out_ref.shape, 1)
        contrib = (jnp.where(sub == 0, pos_sum, 0.0)
                   + jnp.where(sub == 1, neg_sum, 0.0)
                   + jnp.where(sub == 2, pos_cnt, 0.0)
                   + jnp.where(sub == 3, neg_cnt, 0.0))
        out_ref[...] += contrib

    grid = (NUM_SPLITS, blocks_per_split)

    # VMEM budget: 2 inputs x 2 pipeline buffers x tile + label tiles + output blocks.
    tile_bytes = block_rows * feat * in_itemsize
    resident = 2 * 2 * tile_bytes + 2 * block_rows * 4 + 2 * 8 * 128 * 4
    vmem_limit = int(min(max(2 * resident, 16 * 1024 * 1024), 48 * 1024 * 1024))

    cost = pl.CostEstimate(
        flops=4 * batch * feat,
        transcendentals=batch,
        bytes_accessed=2 * batch * feat * in_itemsize + batch * 4 + NUM_SPLITS * 8 * 128 * 4,
    )

    raw = pl.pallas_call(
        kernel,
        grid=grid,
        out_shape=jax.ShapeDtypeStruct((NUM_SPLITS, 8, 128), jnp.float32),
        in_specs=[
            pl.BlockSpec((block_rows, feat), row_block_map),
            pl.BlockSpec((block_rows, feat), row_block_map),
            pl.BlockSpec((block_rows, 1), row_block_map),
        ],
        out_specs=pl.BlockSpec((1, 8, 128), lambda i, j: (i, 0, 0)),
        compiler_params=pltpu.CompilerParams(
            dimension_semantics=("parallel", "arbitrary"),
            vmem_limit_bytes=vmem_limit,
        ),
        cost_estimate=cost,
    )(output1, output2, label_f)

    # Finalize: combine per-split partials, apply the PyTorch branch guards.
    parts = raw[:, :4, 0]                         # (NUM_SPLITS, 4)
    pos_sum = jnp.sum(parts[:, 0])
    neg_sum = jnp.sum(parts[:, 1])
    pos_cnt = jnp.sum(parts[:, 2])
    neg_cnt = jnp.sum(parts[:, 3])

    pos_loss = jnp.where(pos_cnt > 0.0, pos_sum / jnp.maximum(pos_cnt, 1.0), 0.0)
    neg_loss = jnp.where(neg_cnt > 0.0, neg_sum / jnp.maximum(neg_cnt, 1.0), 0.0)
    return pos_loss + neg_loss


def reference_loss(output1, output2, label, margin=MARGIN):
    """Pure-JAX reference matching the PyTorch module."""
    diff = output1.astype(jnp.float32) - output2.astype(jnp.float32) + EPS
    dist = jnp.sqrt(jnp.sum(diff * diff, axis=1))
    lab = jnp.asarray(label).astype(jnp.float32).reshape(-1)
    pos = lab == 1.0
    neg = lab == 0.0
    pos_cnt = jnp.sum(pos)
    neg_cnt = jnp.sum(neg)
    pos_loss = jnp.where(pos_cnt > 0,
                         jnp.sum(jnp.where(pos, dist ** 2, 0.0)) / jnp.maximum(pos_cnt, 1),
                         0.0)
    neg_loss = jnp.where(neg_cnt > 0,
                         jnp.sum(jnp.where(neg, jnp.maximum(margin - dist, 0.0) ** 2, 0.0))
                         / jnp.maximum(neg_cnt, 1),
                         0.0)
    return pos_loss + neg_loss


if __name__ == "__main__":
    key = jax.random.PRNGKey(0)
    k1, k2, k3, k4 = jax.random.split(key, 4)

    # 1) small mixed batch (typical pair batch for this module)
    B, D = 8, 32
    o1 = jax.random.normal(k1, (B, D), dtype=jnp.float32)
    o2 = jax.random.normal(k2, (B, D), dtype=jnp.float32)
    lab = jnp.array([[1], [0], [1], [0], [1], [1], [0], [0]], dtype=jnp.float32)
    got = jax.block_until_ready(improved_contrastive_loss(o1, o2, lab))
    want = reference_loss(o1, o2, lab)
    assert jnp.allclose(got, want, rtol=1e-5, atol=1e-5), (got, want)

    # 2) non-tile-aligned batch: exercises multi-block accumulation, clamped duplicate
    #    block and tail-row masking
    B2, D2 = 100, 64
    o1b = jax.random.normal(k3, (B2, D2), dtype=jnp.float32)
    o2b = jax.random.normal(k4, (B2, D2), dtype=jnp.float32)
    labb = (jax.random.uniform(jax.random.PRNGKey(1), (B2, 1)) > 0.5).astype(jnp.float32)
    got2 = jax.block_until_ready(improved_contrastive_loss(o1b, o2b, labb, block_rows=16))
    want2 = reference_loss(o1b, o2b, labb)
    assert jnp.allclose(got2, want2, rtol=1e-5, atol=1e-5), (got2, want2)

    # 3) all-positive labels: exercises the "no negatives" branch guard
    lab_pos = jnp.ones((B, 1), dtype=jnp.float32)
    got3 = jax.block_until_ready(improved_contrastive_loss(o1, o2, lab_pos))
    want3 = reference_loss(o1, o2, lab_pos)
    assert jnp.allclose(got3, want3, rtol=1e-5, atol=1e-5), (got3, want3)

    print("KERNEL_OK")
</pallas_src>

<mosaic_0001>
module attributes {stable_mosaic.version = 11 : i64} {
  func.func @kernel(%arg0: i32, %arg1: i32, %arg2: memref<8x32xf32, #tpu.memory_space<vmem>>, %arg3: memref<8x32xf32, #tpu.memory_space<vmem>>, %arg4: memref<8x1xf32, #tpu.memory_space<vmem>>, %arg5: memref<1x8x128xf32, #tpu.memory_space<vmem>>) attributes {dimension_semantics = [#tpu.dimension_semantics<parallel>, #tpu.dimension_semantics<arbitrary>], iteration_bounds = array<i64: 2, 1>, scalar_prefetch = 0 : i64, scratch_operands = 0 : i64, tpu.core_type = #tpu.core_type<tc>, window_params = [{transform_indices = @transform_0, window_bounds = array<i64: 8, 32>}, {transform_indices = @transform_1, window_bounds = array<i64: 8, 32>}, {transform_indices = @transform_2, window_bounds = array<i64: 8, 1>}, {transform_indices = @transform_3, window_bounds = array<i64: 1, 8, 128>}]} {
    %c0_i32 = arith.constant 0 : i32
    %0 = arith.cmpi eq, %arg1, %c0_i32 : i32
    %1 = arith.extui %0 : i1 to i32
    %c0_i32_0 = arith.constant 0 : i32
    %2 = arith.cmpi ne, %1, %c0_i32_0 : i32
    scf.if %2 {
      %cst_34 = arith.constant 0.000000e+00 : f32
      %85 = vector.broadcast %cst_34 : f32 to vector<1x8x128xf32>
      %c0_35 = arith.constant 0 : index
      %c0_36 = arith.constant 0 : index
      %c0_37 = arith.constant 0 : index
      %86 = vector.load %arg5[%c0_35, %c0_36, %c0_37] : memref<1x8x128xf32, #tpu.memory_space<vmem>>, vector<1x8x128xf32>
      tpu.vector_store %arg5[%c0_35, %c0_36, %c0_37], %85 {strides = array<i32>} : memref<1x8x128xf32, #tpu.memory_space<vmem>>, vector<1x8x128xf32>,
    } else {
    }
    %c0 = arith.constant 0 : index
    %c0_1 = arith.constant 0 : index
    %3 = vector.load %arg2[%c0, %c0_1] : memref<8x32xf32, #tpu.memory_space<vmem>>, vector<8x32xf32>
    %c0_2 = arith.constant 0 : index
    %c0_3 = arith.constant 0 : index
    %4 = vector.load %arg3[%c0_2, %c0_3] : memref<8x32xf32, #tpu.memory_space<vmem>>, vector<8x32xf32>
    %c0_4 = arith.constant 0 : index
    %c0_5 = arith.constant 0 : index
    %5 = vector.load %arg4[%c0_4, %c0_5] : memref<8x1xf32, #tpu.memory_space<vmem>>, vector<8x1xf32>
    %c1_i32 = arith.constant 1 : i32
    %6 = arith.muli %arg0, %c1_i32 : i32
    %7 = arith.addi %6, %arg1 : i32
    %c8_i32 = arith.constant 8 : i32
    %8 = arith.muli %7, %c8_i32 : i32
    %9 = tpu.iota {dimensions = array<i32: 0>} : vector<8x1xi32>
    %10 = vector.broadcast %8 : i32 to vector<8x1xi32>
    %11 = arith.addi %10, %9 : vector<8x1xi32>
    %c8_i32_6 = arith.constant 8 : i32
    %12 = vector.broadcast %c8_i32_6 : i32 to vector<8x1xi32>
    %13 = arith.cmpi slt, %11, %12 : vector<8x1xi32>
    %14 = arith.subf %3, %4 : vector<8x32xf32>
    %cst = arith.constant 9.99999997E-7 : f32
    %15 = vector.broadcast %cst : f32 to vector<8x32xf32>
    %16 = arith.addf %14, %15 : vector<8x32xf32>
    %17 = arith.mulf %16, %16 : vector<8x32xf32>
    %cst_7 = arith.constant dense<0.000000e+00> : vector<8xf32>
    %18 = vector.multi_reduction <add>, %17, %cst_7 [1] : vector<8x32xf32> to vector<8xf32>
    %19 = vector.shape_cast %18 : vector<8xf32> to vector<8x1xf32>
    %20 = math.sqrt %19 : vector<8x1xf32>
    %cst_8 = arith.constant 1.000000e+00 : f32
    %21 = vector.broadcast %cst_8 : f32 to vector<8x1xf32>
    %22 = arith.subf %21, %20 : vector<8x1xf32>
    %cst_9 = arith.constant 0.000000e+00 : f32
    %23 = vector.broadcast %cst_9 : f32 to vector<8x1xf32>
    %24 = arith.maximumf %22, %23 : vector<8x1xf32>
    %cst_10 = arith.constant 1.000000e+00 : f32
    %25 = vector.broadcast %cst_10 : f32 to vector<8x1xf32>
    %26 = arith.cmpf oeq, %5, %25 : vector<8x1xf32>
    %27 = arith.andi %13, %26 : vector<8x1xi1>
    %cst_11 = arith.constant 0.000000e+00 : f32
    %28 = vector.broadcast %cst_11 : f32 to vector<8x1xf32>
    %29 = arith.cmpf oeq, %5, %28 : vector<8x1xf32>
    %30 = arith.andi %13, %29 : vector<8x1xi1>
    %cst_12 = arith.constant 0.000000e+00 : f32
    %31 = vector.broadcast %cst_12 : f32 to vector<8x1xf32>
    %32 = arith.select %27, %19, %31 : vector<8x1xi1>, vector<8x1xf32>
    %33 = vector.shape_cast %32 : vector<8x1xf32> to vector<1x8x1xf32>
    %cst_13 = arith.constant dense<0.000000e+00> : vector<1xf32>
    %34 = vector.multi_reduction <add>, %33, %cst_13 [1, 2] : vector<1x8x1xf32> to vector<1xf32>
    %35 = vector.shape_cast %34 : vector<1xf32> to vector<1x1x1xf32>
    %36 = vector.extract %35[0, 0, 0] : f32 from vector<1x1x1xf32>
    %37 = arith.mulf %24, %24 : vector<8x1xf32>
    %cst_14 = arith.constant 0.000000e+00 : f32
    %38 = vector.broadcast %cst_14 : f32 to vector<8x1xf32>
    %39 = arith.select %30, %37, %38 : vector<8x1xi1>, vector<8x1xf32>
    %40 = vector.shape_cast %39 : vector<8x1xf32> to vector<1x8x1xf32>
    %cst_15 = arith.constant dense<0.000000e+00> : vector<1xf32>
    %41 = vector.multi_reduction <add>, %40, %cst_15 [1, 2] : vector<1x8x1xf32> to vector<1xf32>
    %42 = vector.shape_cast %41 : vector<1xf32> to vector<1x1x1xf32>
    %43 = vector.extract %42[0, 0, 0] : f32 from vector<1x1x1xf32>
    %cst_16 = arith.constant 1.000000e+00 : f32
    %cst_17 = arith.constant 0.000000e+00 : f32
    %44 = vector.broadcast %cst_16 : f32 to vector<8x1xf32>
    %45 = vector.broadcast %cst_17 : f32 to vector<8x1xf32>
    %46 = arith.select %27, %44, %45 : vector<8x1xi1>, vector<8x1xf32>
    %47 = vector.shape_cast %46 : vector<8x1xf32> to vector<1x8x1xf32>
    %cst_18 = arith.constant dense<0.000000e+00> : vector<1xf32>
    %48 = vector.multi_reduction <add>, %47, %cst_18 [1, 2] : vector<1x8x1xf32> to vector<1xf32>
    %49 = vector.shape_cast %48 : vector<1xf32> to vector<1x1x1xf32>
    %50 = vector.extract %49[0, 0, 0] : f32 from vector<1x1x1xf32>
    %cst_19 = arith.constant 1.000000e+00 : f32
    %cst_20 = arith.constant 0.000000e+00 : f32
    %51 = vector.broadcast %cst_19 : f32 to vector<8x1xf32>
    %52 = vector.broadcast %cst_20 : f32 to vector<8x1xf32>
    %53 = arith.select %30, %51, %52 : vector<8x1xi1>, vector<8x1xf32>
    %54 = vector.shape_cast %53 : vector<8x1xf32> to vector<1x8x1xf32>
    %cst_21 = arith.constant dense<0.000000e+00> : vector<1xf32>
    %55 = vector.multi_reduction <add>, %54, %cst_21 [1, 2] : vector<1x8x1xf32> to vector<1xf32>
    %56 = vector.shape_cast %55 : vector<1xf32> to vector<1x1x1xf32>
    %57 = vector.extract %56[0, 0, 0] : f32 from vector<1x1x1xf32>
    %58 = tpu.iota {dimensions = array<i32: 1>} : vector<1x8x128xi32>
    %c0_i32_22 = arith.constant 0 : i32
    %59 = vector.broadcast %c0_i32_22 : i32 to vector<1x8x128xi32>
    %60 = arith.cmpi eq, %58, %59 : vector<1x8x128xi32>
    %cst_23 = arith.constant 0.000000e+00 : f32
    %61 = vector.broadcast %36 : f32 to vector<1x8x128xf32>
    %62 = vector.broadcast %cst_23 : f32 to vector<1x8x128xf32>
    %63 = arith.select %60, %61, %62 : vector<1x8x128xi1>, vector<1x8x128xf32>
    %c1_i32_24 = arith.constant 1 : i32
    %64 = vector.broadcast %c1_i32_24 : i32 to vector<1x8x128xi32>
    %65 = arith.cmpi eq, %58, %64 : vector<1x8x128xi32>
    %cst_25 = arith.constant 0.000000e+00 : f32
    %66 = vector.broadcast %43 : f32 to vector<1x8x128xf32>
    %67 = vector.broadcast %cst_25 : f32 to vector<1x8x128xf32>
    %68 = arith.select %65, %66, %67 : vector<1x8x128xi1>, vector<1x8x128xf32>
    %69 = arith.addf %63, %68 : vector<1x8x128xf32>
    %c2_i32 = arith.constant 2 : i32
    %70 = vector.broadcast %c2_i32 : i32 to vector<1x8x128xi32>
    %71 = arith.cmpi eq, %58, %70 : vector<1x8x128xi32>
    %cst_26 = arith.constant 0.000000e+00 : f32
    %72 = vector.broadcast %50 : f32 to vector<1x8x128xf32>
    %73 = vector.broadcast %cst_26 : f32 to vector<1x8x128xf32>
    %74 = arith.select %71, %72, %73 : vector<1x8x128xi1>, vector<1x8x128xf32>
    %75 = arith.addf %69, %74 : vector<1x8x128xf32>
    %c3_i32 = arith.constant 3 : i32
    %76 = vector.broadcast %c3_i32 : i32 to vector<1x8x128xi32>
    %77 = arith.cmpi eq, %58, %76 : vector<1x8x128xi32>
    %cst_27 = arith.constant 0.000000e+00 : f32
    %78 = vector.broadcast %57 : f32 to vector<1x8x128xf32>
    %79 = vector.broadcast %cst_27 : f32 to vector<1x8x128xf32>
    %80 = arith.select %77, %78, %79 : vector<1x8x128xi1>, vector<1x8x128xf32>
    %81 = arith.addf %75, %80 : vector<1x8x128xf32>
    %c0_28 = arith.constant 0 : index
    %c0_29 = arith.constant 0 : index
    %c0_30 = arith.constant 0 : index
    %82 = vector.load %arg5[%c0_28, %c0_29, %c0_30] : memref<1x8x128xf32, #tpu.memory_space<vmem>>, vector<1x8x128xf32>
    %83 = arith.addf %82, %81 : vector<1x8x128xf32>
    %c0_31 = arith.constant 0 : index
    %c0_32 = arith.constant 0 : index
    %c0_33 = arith.constant 0 : index
    %84 = vector.load %arg5[%c0_31, %c0_32, %c0_33] : memref<1x8x128xf32, #tpu.memory_space<vmem>>, vector<1x8x128xf32>
    tpu.vector_store %arg5[%c0_31, %c0_32, %c0_33], %83 {strides = array<i32>} : memref<1x8x128xf32, #tpu.memory_space<vmem>>, vector<1x8x128xf32>,
    return
  }
  func.func @transform_0(%arg0: i32, %arg1: i32) -> (i32, i32) {
    %c1_i32 = arith.constant 1 : i32
    %0 = arith.muli %arg0, %c1_i32 : i32
    %1 = arith.addi %0, %arg1 : i32
    %c0_i32 = arith.constant 0 : i32
    %2 = arith.minsi %1, %c0_i32 : i32
    %c0_i32_0 = arith.constant 0 : i32
    %c0_i32_1 = arith.constant 0 : i32
    return %2, %c0_i32_0 : i32, i32
  }
  func.func @transform_1(%arg0: i32, %arg1: i32) -> (i32, i32) {
    %c1_i32 = arith.constant 1 : i32
    %0 = arith.muli %arg0, %c1_i32 : i32
    %1 = arith.addi %0, %arg1 : i32
    %c0_i32 = arith.constant 0 : i32
    %2 = arith.minsi %1, %c0_i32 : i32
    %c0_i32_0 = arith.constant 0 : i32
    %c0_i32_1 = arith.constant 0 : i32
    return %2, %c0_i32_0 : i32, i32
  }
  func.func @transform_2(%arg0: i32, %arg1: i32) -> (i32, i32) {
    %c1_i32 = arith.constant 1 : i32
    %0 = arith.muli %arg0, %c1_i32 : i32
    %1 = arith.addi %0, %arg1 : i32
    %c0_i32 = arith.constant 0 : i32
    %2 = arith.minsi %1, %c0_i32 : i32
    %c0_i32_0 = arith.constant 0 : i32
    %c0_i32_1 = arith.constant 0 : i32
    return %2, %c0_i32_0 : i32, i32
  }
  func.func @transform_3(%arg0: i32, %arg1: i32) -> (i32, i32, i32) {
    %c0_i32 = arith.constant 0 : i32
    %c0_i32_0 = arith.constant 0 : i32
    %c0_i32_1 = arith.constant 0 : i32
    return %arg0, %c0_i32, %c0_i32_0 : i32, i32, i32
  }
}

</mosaic_0001>

<llo_original>
// kernel: tpu_custom_call.1
$region0: #{tpu_custom_call.1}
  #allocation0 [shape = 'u32[]', space=smem, size = 0x4, offset = 0x4, fixed_abs, tag = 'smem constant byte address 0x4 - core index']
  #allocation1 [shape = 'u32[144,128]{1,0:T(1,128)}', space=vmem, size = 0x12000, scoped, tag = 'internal scratch']
  %s0 = inlined_call_operand.vmem [shape: f32[8,32], index: 0, kind: input, shape index: {}]
  %s1 = inlined_call_operand.hbm [shape: f32[8,32], index: 1, kind: input, shape index: {}]
  %s2 = inlined_call_operand.vmem [shape: f32[8,1], index: 2, kind: input, shape index: {}]
  %s3 = inlined_call_operand.hbm [shape: f32[2,8,128], index: 3, kind: output, shape index: {}]
  %s4 = sld [smem:[#allocation0]]
  $region53: #{tpu_custom_call.1} parent=0
    _
  %s6 = ssub.s32 1, %s4
  %s7 = scalar_select 0, %s6, %s4
  $region1: #{tpu_custom_call.1} parent=0
    #allocation2 [shape = 'u8[8192]{0}', space=vmem, size = 0x2000, scoped, tag = 'input window, operand 1']
    #allocation3 [shape = 's32[2]{0}', space=sflag, size = 0x8, scoped, tag = 'scoped memory for tpu_custom_call.1']
    #allocation4 [shape = 's32[2]{0}', space=sflag, size = 0x8, scoped, tag = 'scoped memory for tpu_custom_call.1']
    #allocation5 [shape = 'u8[8192]{0}', space=vmem, size = 0x2000, scoped, tag = 'output window, operand 0']
    %8 = vsyncpa [#allocation3], 0
    %s9 = scalar_lea.sflag [#allocation3], 1
    %10 = vsyncpa %s9, 0
    %11 = vsyncpa [#allocation4], 0
    %s12 = scalar_lea.sflag [#allocation4], 1
    %13 = vsyncpa %s12, 0
    loop: start=0, step=1, limit=4
    $region2: #{tpu_custom_call.1} parent=1 // loop_pre_header
      _
    $region3: #{tpu_custom_call.1} parent=1 // loop_header
      %s15 = sphi 0, %s19
      %p16 = scmp.ge.s32.totalorder %s15, 4
      %s22 = sphi 0, %s34
      %s23 = sphi 0, %s30
      %s24 = sphi 0, %s22
      %s25 = sphi 0, %s23
      %s26 = sphi 0, %s24
      %s27 = sphi 0, %s25
      %s43 = sphi 0, %s45
      %s46 = sphi 0, %s43
      %s47 = sphi 0, %s46
      %s63 = sphi 0, %s47
      %s75 = sphi 0, %s77
      %s78 = sphi 0, %s75
      %s79 = sphi 0, %s78
      %s95 = sphi 0, %s79
      %s107 = sphi 0, %s109
      %s110 = sphi 0, %s107
      %s111 = sphi 0, %s110
      %s127 = sphi 0, %s111
      %s133 = sphi 0, %s135
      %s136 = sphi 0, %s133
      %s137 = sphi 0, %s136
      %s153 = sphi 0, %s137
    $region4: #{tpu_custom_call.1} parent=1 // loop_header_branch
      %18 = sbr.rel (%p16) target = $region8
    $region5: #{tpu_custom_call.1} parent=1 // loop_body
      %s20 = ssub.s32 %s15, 1
      %s21 = ssub.s32 %s15, 2
      %s28 = sadd.s32 1, %s23
      %p29 = scmp.ge.s32.totalorder %s28, 1
      %s30 = scalar_select %p29, 0, %s28
      %s31 = sadd.s32 1, %s22
      %s32 = scalar_select %p29, %s31, %s22
      %p33 = scmp.ge.s32.totalorder %s32, 2
      %s34 = scalar_select %p33, 0, %s32
      %s35 = sadd.s32 %s22, %s23
      %p36 = scmp.lt.s32.totalorder %s35, 0
      %s37 = scalar_select %p36, %s35, 0
      %s38 = sadd.s32 %s34, %s30
      %p39 = scmp.lt.s32.totalorder %s38, 0
      %s40 = scalar_select %p39, %s38, 0
      %s41 = ssub.s32 %s37, %s40
      %p42 = scmp.eq.s32.totalorder %s41, 0
      %s44 = sadd.s32 %s43, 1
      %s45 = scalar_select %p42, %s43, %s44
      %p48 = pneg %p42
      %p49 = scmp.eq.s32.totalorder %s15, 1
      %p50 = por %p48, %p49
      %p51 = scmp.ne.s32.totalorder %s43, %s46
      %p52 = scmp.eq.s32.totalorder %s15, 0
      %p53 = por %p51, %p52
      %p54 = scmp.ne.s32.totalorder %s43, %s46
      %p55 = scmp.eq.s32.totalorder %s20, 1
      %p56 = por %p54, %p55
      %p57 = scmp.ne.s32.totalorder %s46, %s47
      %p58 = scmp.eq.s32.totalorder %s20, 0
      %p59 = por %p57, %p58
      %p60 = scmp.ne.s32.totalorder %s46, %s47
      %p61 = scmp.eq.s32.totalorder %s21, 1
      %p62 = por %p60, %p61
      %p64 = scmp.ne.s32.totalorder %s47, %s63
      %p65 = scmp.eq.s32.totalorder %s21, 0
      %p66 = por %p64, %p65
      %s67 = sadd.s32 %s22, %s23
      %p68 = scmp.lt.s32.totalorder %s67, 0
      %s69 = scalar_select %p68, %s67, 0
      %s70 = sadd.s32 %s34, %s30
      %p71 = scmp.lt.s32.totalorder %s70, 0
      %s72 = scalar_select %p71, %s70, 0
      %s73 = ssub.s32 %s69, %s72
      %p74 = scmp.eq.s32.totalorder %s73, 0
      %s76 = sadd.s32 %s75, 1
      %s77 = scalar_select %p74, %s75, %s76
      %p80 = pneg %p74
      %p81 = scmp.eq.s32.totalorder %s15, 1
      %p82 = por %p80, %p81
      %p83 = scmp.ne.s32.totalorder %s75, %s78
      %p84 = scmp.eq.s32.totalorder %s15, 0
      %p85 = por %p83, %p84
      %p86 = scmp.ne.s32.totalorder %s75, %s78
      %p87 = scmp.eq.s32.totalorder %s20, 1
      %p88 = por %p86, %p87
      %p89 = scmp.ne.s32.totalorder %s78, %s79
      %p90 = scmp.eq.s32.totalorder %s20, 0
      %p91 = por %p89, %p90
      %p92 = scmp.ne.s32.totalorder %s78, %s79
      %p93 = scmp.eq.s32.totalorder %s21, 1
      %p94 = por %p92, %p93
      %p96 = scmp.ne.s32.totalorder %s79, %s95
      %p97 = scmp.eq.s32.totalorder %s21, 0
      %p98 = por %p96, %p97
      %s99 = sadd.s32 %s22, %s23
      %p100 = scmp.lt.s32.totalorder %s99, 0
      %s101 = scalar_select %p100, %s99, 0
      %s102 = sadd.s32 %s34, %s30
      %p103 = scmp.lt.s32.totalorder %s102, 0
      %s104 = scalar_select %p103, %s102, 0
      %s105 = ssub.s32 %s101, %s104
      %p106 = scmp.eq.s32.totalorder %s105, 0
      %s108 = sadd.s32 %s107, 1
      %s109 = scalar_select %p106, %s107, %s108
      %p112 = pneg %p106
      %p113 = scmp.eq.s32.totalorder %s15, 1
      %p114 = por %p112, %p113
      %p115 = scmp.ne.s32.totalorder %s107, %s110
      %p116 = scmp.eq.s32.totalorder %s15, 0
      %p117 = por %p115, %p116
      %p118 = scmp.ne.s32.totalorder %s107, %s110
      %p119 = scmp.eq.s32.totalorder %s20, 1
      %p120 = por %p118, %p119
      %p121 = scmp.ne.s32.totalorder %s110, %s111
      %p122 = scmp.eq.s32.totalorder %s20, 0
      %p123 = por %p121, %p122
      %p124 = scmp.ne.s32.totalorder %s110, %s111
      %p125 = scmp.eq.s32.totalorder %s21, 1
      %p126 = por %p124, %p125
      %p128 = scmp.ne.s32.totalorder %s111, %s127
      %p129 = scmp.eq.s32.totalorder %s21, 0
      %p130 = por %p128, %p129
      %s131 = ssub.s32 %s22, %s34
      %p132 = scmp.eq.s32.totalorder %s131, 0
      %s134 = sadd.s32 %s133, 1
      %s135 = scalar_select %p132, %s133, %s134
      %p138 = pneg %p132
      %p139 = scmp.eq.s32.totalorder %s15, 1
      %p140 = por %p138, %p139
      %p141 = scmp.ne.s32.totalorder %s133, %s136
      %p142 = scmp.eq.s32.totalorder %s15, 0
      %p143 = por %p141, %p142
      %p144 = scmp.ne.s32.totalorder %s133, %s136
      %p145 = scmp.eq.s32.totalorder %s20, 1
      %p146 = por %p144, %p145
      %p147 = scmp.ne.s32.totalorder %s136, %s137
      %p148 = scmp.eq.s32.totalorder %s20, 0
      %p149 = por %p147, %p148
      %p150 = scmp.ne.s32.totalorder %s136, %s137
      %p151 = scmp.eq.s32.totalorder %s21, 1
      %p152 = por %p150, %p151
      %p154 = scmp.ne.s32.totalorder %s137, %s153
      %p155 = scmp.eq.s32.totalorder %s21, 0
      %p156 = por %p154, %p155
      %p157 = scmp.le.s32.totalorder 1, %s15
      %p158 = scmp.lt.s32.totalorder %s15, 3
      %p159 = pnand %p157, %p158
      %p160 = pneg %p159
      // Predicated region
      $region9: #{tpu_custom_call.1} parent=5 // pred_check
        _
      $region10: #{tpu_custom_call.1} parent=5 // pred_check_branch
        %162 = sbr.rel (%p159) target = $region12
      $region11: #{tpu_custom_call.1} parent=5 // pred_region
        %s163 = ssub.s32 %s15, 1
      $region12: #{tpu_custom_call.1} parent=5 // pred_fallthru
        _
      %p164 = scmp.lt.s32.totalorder %s15, 2
      // Predicated region
      $region13: #{tpu_custom_call.1} parent=5 // pred_check
        %p165 = pneg %p164
      $region14: #{tpu_custom_call.1} parent=5 // pred_check_branch
        %167 = sbr.rel (%p165) target = $region16
      $region15: #{tpu_custom_call.1} parent=5 // pred_region
        // Predicated region
        $region17: #{tpu_custom_call.1} parent=15 // pred_check
          %p168 = pneg %p53
        $region18: #{tpu_custom_call.1} parent=15 // pred_check_branch
          %170 = sbr.rel (%p168) target = $region20
        $region19: #{tpu_custom_call.1} parent=15 // pred_region
          %s171 = sadd.s32 %s22, %s23
          %p172 = scmp.lt.s32.totalorder %s171, 0
          %s173 = scalar_select %p172, %s171, 0
          %p174 = scmp.lt.s32.totalorder %s173, 0
          %s175 = scalar_select %p174, %s173, 0
          %s176 = smul.addr %s175, 8
          %s177 = scalar_lea.vmem %s0, %s176
          %s178 = sadd.s32 %s22, %s23
          %p179 = scmp.lt.s32.totalorder %s178, 0
          %s180 = scalar_select %p179, %s178, 0
        $region20: #{tpu_custom_call.1} parent=15 // pred_fallthru
          _
        // Predicated region
        $region21: #{tpu_custom_call.1} parent=15 // pred_check
          %p181 = pneg %p85
        $region22: #{tpu_custom_call.1} parent=15 // pred_check_branch
          %183 = sbr.rel (%p181) target = $region24
        $region23: #{tpu_custom_call.1} parent=15 // pred_region
          %s184 = sand.u32 %s75, 1
          %s185 = scalar_lea.sflag [#allocation3], %s184
          %s186 = sand.u32 %s75, 1
          %s187 = smul.addr %s186, 8
          %s188 = scalar_lea.vmem [#allocation2], %s187
          %s189 = sadd.s32 %s22, %s23
          %p190 = scmp.lt.s32.totalorder %s189, 0
          %s191 = scalar_select %p190, %s189, 0
          %s193 = ssub.s32 128, 128
          %194 = vsyncadd %s185, %s193
          %s195 = smul.addr %s191, 128
          %s196 = scalar_lea.hbm %s1, %s195
          %s198 = sshll.u32 %s188, 4
          %s199 = int_to_ptr.vmem [resolvable:$true] %s198
          %201 = dma.hbm_to_vmem [thread:$0]  %s196, 128, %s199, %s185
        $region24: #{tpu_custom_call.1} parent=15 // pred_fallthru
          _
        // Predicated region
        $region25: #{tpu_custom_call.1} parent=15 // pred_check
          %p202 = pneg %p117
        $region26: #{tpu_custom_call.1} parent=15 // pred_check_branch
          %204 = sbr.rel (%p202) target = $region28
        $region27: #{tpu_custom_call.1} parent=15 // pred_region
          %s205 = sadd.s32 %s22, %s23
          %p206 = scmp.lt.s32.totalorder %s205, 0
          %s207 = scalar_select %p206, %s205, 0
          %p208 = scmp.lt.s32.totalorder %s207, 0
          %s209 = scalar_select %p208, %s207, 0
          %s210 = smul.addr %s209, 8
          %s211 = scalar_lea.vmem %s2, %s210
          %s212 = sadd.s32 %s22, %s23
          %p213 = scmp.lt.s32.totalorder %s212, 0
          %s214 = scalar_select %p213, %s212, 0
        $region28: #{tpu_custom_call.1} parent=15 // pred_fallthru
          _
      $region16: #{tpu_custom_call.1} parent=5 // pred_fallthru
        _
      %p215 = scmp.le.s32.totalorder 1, %s15
      %p216 = scmp.lt.s32.totalorder %s15, 3
      %p217 = pnand %p215, %p216
      %p218 = pneg %p217
      // Predicated region
      $region29: #{tpu_custom_call.1} parent=5 // pred_check
        _
      $region30: #{tpu_custom_call.1} parent=5 // pred_check_branch
        %220 = sbr.rel (%p217) target = $region32
      $region31: #{tpu_custom_call.1} parent=5 // pred_region
        %s221 = ssub.s32 %s15, 1
        %s222 = sand.u32 %s78, 1
        %s223 = scalar_lea.sflag [#allocation3], %s222
        %s224 = sand.u32 %s78, 1
        %s225 = smul.addr %s224, 8
        %s226 = scalar_lea.vmem [#allocation2], %s225
        // Predicated region
        $region33: #{tpu_custom_call.1} parent=31 // pred_check
          %p227 = pneg %p91
        $region34: #{tpu_custom_call.1} parent=31 // pred_check_branch
          %229 = sbr.rel (%p227) target = $region36
        $region35: #{tpu_custom_call.1} parent=31 // pred_region
          %230 = dma.done %s223, 128
        $region36: #{tpu_custom_call.1} parent=31 // pred_fallthru
          _
        %s231 = sadd.s32 %s24, %s25
        %p232 = scmp.lt.s32.totalorder %s231, 0
        %s233 = scalar_select %p232, %s231, 0
        %p234 = scmp.lt.s32.totalorder %s233, 0
        %s235 = scalar_select %p234, %s233, 0
        %s236 = smul.addr %s235, 8
        %s237 = scalar_lea.vmem %s0, %s236
        %p238 = pneg %p59
        %p239 = pneg %p56
        %s240 = sand.u32 %s78, 1
        %s241 = scalar_lea.sflag [#allocation3], %s240
        %s242 = sand.u32 %s78, 1
        %s243 = smul.addr %s242, 8
        %s244 = scalar_lea.vmem [#allocation2], %s243
        %p245 = pneg %p91
        %p246 = pneg %p88
        %s247 = sadd.s32 %s24, %s25
        %p248 = scmp.lt.s32.totalorder %s247, 0
        %s249 = scalar_select %p248, %s247, 0
        %p250 = scmp.lt.s32.totalorder %s249, 0
        %s251 = scalar_select %p250, %s249, 0
        %s252 = smul.addr %s251, 8
        %s253 = scalar_lea.vmem %s2, %s252
        %p254 = pneg %p123
        %p255 = pneg %p120
        %p256 = pneg %p149
        %p257 = pneg %p146
        %s258 = sand.u32 %s136, 1
        %s259 = scalar_lea.sflag [#allocation4], %s258
        %s260 = sand.u32 %s136, 1
        %s261 = smul.addr %s260, 8
        %s262 = scalar_lea.vmem [#allocation5], %s261
        %s263 = sadd.s32 %s24, %s25
        %p264 = scmp.lt.s32.totalorder %s263, 0
        %s265 = scalar_select %p264, %s263, 0
        %p266 = scmp.lt.s32.totalorder %s265, 0
        %s267 = scalar_select %p266, %s265, 0
        %s268 = smul.addr %s267, 8
        %s269 = scalar_lea.vmem %s0, %s268
        %s270 = sadd.s32 %s24, %s25
        %p271 = scmp.lt.s32.totalorder %s270, 0
        %s272 = scalar_select %p271, %s270, 0
        %s273 = sadd.s32 %s24, %s25
        %p274 = scmp.lt.s32.totalorder %s273, 0
        %s275 = scalar_select %p274, %s273, 0
        %s276 = sadd.s32 %s24, %s25
        %p277 = scmp.lt.s32.totalorder %s276, 0
        %s278 = scalar_select %p277, %s276, 0
        %p279 = scmp.lt.s32.totalorder %s278, 0
        %s280 = scalar_select %p279, %s278, 0
        %s281 = smul.addr %s280, 8
        %s282 = scalar_lea.vmem %s2, %s281
        %s283 = sadd.s32 %s24, %s25
        %p284 = scmp.lt.s32.totalorder %s283, 0
        %s285 = scalar_select %p284, %s283, 0
        %p286 = scmp.eq.s32.totalorder %s25, 0
        // Predicated region
        $region37: #{tpu_custom_call.1} parent=31 // pred_check
          %p287 = pneg %p286
        $region38: #{tpu_custom_call.1} parent=31 // pred_check_branch
          %289 = sbr.rel (%p287) target = $region40
        $region39: #{tpu_custom_call.1} parent=31 // pred_region
          %290 = vst [vmem:[%s262] sm:$0xff] 0.0
        $region40: #{tpu_custom_call.1} parent=31 // pred_fallthru
          _
        %v291 = vld [vmem:[%s269] sm:$0xff]
        %v292 = vld [vmem:[%s226] sm:$0xff]
        %v293 = vld [vmem:[%s282] sm:$0xff]
        %s294 = sadd.s32 %s24, %s25
        %s295 = smul.u32 %s294, 8
        %v296 = vlaneseq
        %v297 = vshrl.u32 %v296, 7
        %v298 = vstv %s295
        %v299 = vadd.s32 %v298, %v297
        %vm300 = vcmp.lt.s32.totalorder %v299, 8
        %v301 = vsub.f32 %v291, %v292
        %v302 = vadd.f32 %v301, 1e-06
        %v303 = vmul.f32 %v302, %v302
        %vm304 = vcmask 261120
        %v305 = vsel %vm304, %v303, 0.0
        %306 = vadd.xlane.f32.xlu0 %v305
        %v307 = vpop.xlane.xlu0 %306
        %v308 = vrsqrt.pop %v307
        %v309 = vmul.f32 %v307, %v308
        %vm310 = vcmp.eq.f32.partialorder %v307, inf
        %v311 = vsel %vm310, %v307, %v309
        %vm312 = vcmp.eq.f32.partialorder %v307, 0.0
        %v313 = vand.u32 %v307, 2147483648
        %v314 = vsel %vm312, %v313, %v311
        %v315 = vsub.f32 1.0, %v314
        %v316 = vmax.f32 %v315, 0.0
        %vm317 = vcmp.eq.f32.partialorder %v293, 1.0
        %vm318 = vmand %vm300, %vm317
        %vm319 = vcmp.eq.f32.partialorder %v293, 0.0
        %vm320 = vmand %vm300, %vm319
        %v321 = vsel %vm318, %v307, 0.0
        %vm322 = vcmask 7168
        %v323 = vsel %vm322, %v321, 0.0
        %324 = vadd.xlane.f32.xlu0 %v323
        %v325 = vpop.xlane.xlu0 %324
        %v326 = vrot.slane %v325, 4
        %v327 = vadd.f32 %v325, %v326
        %v328 = vrot.slane %v327, 2
        %v329 = vadd.f32 %v327, %v328
        %v330 = vrot.slane %v329, 1
        %v331 = vadd.f32 %v329, %v330
        %s332 = vtos %v331
        %v333 = vmul.f32 %v316, %v316
        %v334 = vsel %vm320, %v333, 0.0
        %v335 = vsel %vm322, %v334, 0.0
        %336 = vadd.xlane.f32.xlu0 %v335
        %v337 = vpop.xlane.xlu0 %336
        %v338 = vrot.slane %v337, 4
        %v339 = vadd.f32 %v337, %v338
        %v340 = vrot.slane %v339, 2
        %v341 = vadd.f32 %v339, %v340
        %v342 = vrot.slane %v341, 1
        %v343 = vadd.f32 %v341, %v342
        %s344 = vtos %v343
        %v345 = vsel %vm318, 1.0, 0.0
        %v346 = vsel %vm322, %v345, 0.0
        %347 = vadd.xlane.f32.xlu0 %v346
        %v348 = vpop.xlane.xlu0 %347
        %v349 = vrot.slane %v348, 4
        %v350 = vadd.f32 %v348, %v349
        %v351 = vrot.slane %v350, 2
        %v352 = vadd.f32 %v350, %v351
        %v353 = vrot.slane %v352, 1
        %v354 = vadd.f32 %v352, %v353
        %s355 = vtos %v354
        %v356 = vsel %vm320, 1.0, 0.0
        %v357 = vsel %vm322, %v356, 0.0
        %358 = vadd.xlane.f32.xlu0 %v357
        %v359 = vpop.xlane.xlu0 %358
        %v360 = vrot.slane %v359, 4
        %v361 = vadd.f32 %v359, %v360
        %v362 = vrot.slane %v361, 2
        %v363 = vadd.f32 %v361, %v362
        %v364 = vrot.slane %v363, 1
        %v365 = vadd.f32 %v363, %v364
        %s366 = vtos %v365
        %vm367 = vcmp.eq.s32.totalorder %v297, 0
        %v368 = vstv %s332
        %v369 = vsel %vm367, %v368, 0.0
        %vm370 = vcmp.eq.s32.totalorder %v297, 1
        %v371 = vstv %s344
        %v372 = vsel %vm370, %v371, 0.0
        %v373 = vadd.f32 %v369, %v372
        %vm374 = vcmp.eq.s32.totalorder %v297, 2
        %v375 = vstv %s355
        %v376 = vsel %vm374, %v375, 0.0
        %v377 = vadd.f32 %v373, %v376
        %vm378 = vcmp.eq.s32.totalorder %v297, 3
        %v379 = vstv %s366
        %v380 = vsel %vm378, %v379, 0.0
        %v381 = vadd.f32 %v377, %v380
        %v382 = vld [vmem:[%s262] sm:$0xff]
        %v383 = vadd.f32 %v382, %v381
        %384 = vst [vmem:[%s262] sm:$0xff] %v383
        %s385 = sand.u32 %s136, 1
        %s386 = scalar_lea.sflag [#allocation4], %s385
        %s387 = sand.u32 %s136, 1
        %s388 = smul.addr %s387, 8
        %s389 = scalar_lea.vmem [#allocation5], %s388
        // Predicated region
        $region41: #{tpu_custom_call.1} parent=31 // pred_check
          %p390 = pneg %p146
        $region42: #{tpu_custom_call.1} parent=31 // pred_check_branch
          %392 = sbr.rel (%p390) target = $region44
        $region43: #{tpu_custom_call.1} parent=31 // pred_region
          %s394 = ssub.s32 128, 128
          %395 = vsyncadd %s386, %s394
          %s396 = smul.addr %s24, 128
          %s397 = scalar_lea.hbm %s3, %s396
          %s399 = sshll.u32 %s389, 4
          %s400 = int_to_ptr.vmem [resolvable:$true] %s399
          %402 = dma.vmem_to_hbm [thread:$0]  %s400, 128, %s397, %s386
        $region44: #{tpu_custom_call.1} parent=31 // pred_fallthru
          _
      $region32: #{tpu_custom_call.1} parent=5 // pred_fallthru
        _
      %p403 = scmp.le.s32.totalorder 2, %s15
      // Predicated region
      $region45: #{tpu_custom_call.1} parent=5 // pred_check
        %p404 = pneg %p403
      $region46: #{tpu_custom_call.1} parent=5 // pred_check_branch
        %406 = sbr.rel (%p404) target = $region48
      $region47: #{tpu_custom_call.1} parent=5 // pred_region
        %s407 = ssub.s32 %s15, 2
        // Predicated region
        $region49: #{tpu_custom_call.1} parent=47 // pred_check
          %p408 = pneg %p152
        $region50: #{tpu_custom_call.1} parent=47 // pred_check_branch
          %410 = sbr.rel (%p408) target = $region52
        $region51: #{tpu_custom_call.1} parent=47 // pred_region
          %s411 = sand.u32 %s137, 1
          %s412 = scalar_lea.sflag [#allocation4], %s411
          %s413 = sand.u32 %s137, 1
          %s414 = smul.addr %s413, 8
          %s415 = scalar_lea.vmem [#allocation5], %s414
          %416 = dma.done %s412, 128
        $region52: #{tpu_custom_call.1} parent=47 // pred_fallthru
          _
      $region48: #{tpu_custom_call.1} parent=5 // pred_fallthru
        _
    $region6: #{tpu_custom_call.1} parent=1 // loop_footer
      %s19 = sadd.s32 1, %s15
    $region7: #{tpu_custom_call.1} parent=1 // loop_footer_branch
      %14 = sbr.rel target = $region3
    $region8: #{tpu_custom_call.1} parent=1 // loop_exit
      _
    %417 = vsyncpa [#allocation3], 1
    %s418 = scalar_lea.sflag [#allocation3], 1
    %419 = vsyncpa %s418, 1
    %420 = vsyncpa [#allocation4], 1
    %s421 = scalar_lea.sflag [#allocation4], 1
    %422 = vsyncpa %s421, 1

</llo_original>
